<compile_context>
chip_gen: v7x
topology: tpu7x:2x2x1
jax: 0.10.0
libtpu: 0.0.40
codegen_flags: <defaults>
</compile_context>

<pallas_src>
import jax
import jax.numpy as jnp
from jax import lax
from jax.experimental import pallas as pl
from jax.experimental.pallas import tpu as pltpu


def _choose_batch_tile(batch):
    # Multiples of 32 keep the sublane tiling legal for f32 / bf16 / int8 inputs.
    for tb in (512, 256, 128, 64, 32):
        if batch >= tb:
            return tb
    return batch  # tiny batch: single whole-array block (always a legal block shape)


def _make_loss_kernel(num_nar, num_sub, batch_total, batch_tile,
                      narrative_weight, subnarrative_weight, hierarchy_weight,
                      reduction):
    nw = float(narrative_weight)
    sw = float(subnarrative_weight)
    hw = float(hierarchy_weight)

    if reduction == "mean":
        bce_scale_n = 1.0 / (batch_total * num_nar)
        bce_scale_s = 1.0 / (batch_total * num_sub)
    elif reduction == "sum":
        bce_scale_n = 1.0
        bce_scale_s = 1.0
    else:
        raise ValueError(f"unsupported reduction: {reduction!r}")

    # focal + hierarchy terms are always means in the reference module
    inv_bn = 1.0 / (batch_total * num_nar)
    inv_bs = 1.0 / (batch_total * num_sub)
    inv_b = 1.0 / batch_total
    need_mask = (batch_total % batch_tile) != 0

    def loss_kernel(nar_logit_ref, sub_logit_ref, nar_lab_ref, sub_lab_ref,
                    out_ref,
                    pos_n_ref, a_n_ref, b_n_ref, f_n_ref,
                    pos_s_ref, a_s_ref, b_s_ref, f_s_ref, h_ref):
        step = pl.program_id(0)

        @pl.when(step == 0)
        def _init():
            for r in (pos_n_ref, a_n_ref, b_n_ref, f_n_ref,
                      pos_s_ref, a_s_ref, b_s_ref, f_s_ref, h_ref):
                r[...] = jnp.zeros_like(r)

        if need_mask:
            row = step * batch_tile + lax.broadcasted_iota(
                jnp.int32, (batch_tile, 1), 0)
            mask = row < batch_total          # (TB, 1) — rows past the real batch
        else:
            mask = None

        def accumulate(logit_ref, lab_ref, pos_ref, a_ref, b_ref, f_ref):
            # in-kernel casts: inputs arrive in native dtype, no HBM f32 copies
            x = logit_ref[...].astype(jnp.float32)
            y = lab_ref[...].astype(jnp.float32)
            if mask is not None:
                y = jnp.where(mask, y, 0.0)

            # stable log-sigmoid, reused for everything:
            #   log_sigmoid(-x) = log_sigmoid(x) - x,  sigmoid(x) = exp(log_sigmoid(x))
            lsp = jnp.minimum(x, 0.0) - jnp.log1p(jnp.exp(-jnp.abs(x)))
            lsn = lsp - x
            p = jnp.exp(lsp)

            a_el = y * lsp                    # gets pos_weight applied in the epilogue
            b_el = (1.0 - y) * lsn
            omp = 1.0 - p
            f_el = omp * omp * a_el           # (1-p)^2 * y * log_sigmoid(x)
            if mask is not None:
                a_el = jnp.where(mask, a_el, 0.0)
                b_el = jnp.where(mask, b_el, 0.0)
                f_el = jnp.where(mask, f_el, 0.0)

            pos_ref[...] += jnp.sum(y, axis=0, keepdims=True)          # (1, C)
            a_ref[...] += jnp.sum(a_el, axis=0, keepdims=True)         # (1, C)
            b_ref[...] += jnp.sum(b_el, axis=(0, 1), keepdims=True)    # (1, 1)
            f_ref[...] += jnp.sum(f_el, axis=(0, 1), keepdims=True)    # (1, 1)
            return p

        p_n = accumulate(nar_logit_ref, nar_lab_ref,
                         pos_n_ref, a_n_ref, b_n_ref, f_n_ref)
        p_s = accumulate(sub_logit_ref, sub_lab_ref,
                         pos_s_ref, a_s_ref, b_s_ref, f_s_ref)

        # hierarchy: relu(max_c p_sub - max_c p_nar) per row, keepdims keeps it 2-D
        h = jnp.maximum(jnp.max(p_s, axis=1, keepdims=True)
                        - jnp.max(p_n, axis=1, keepdims=True), 0.0)
        if mask is not None:
            h = jnp.where(mask, h, 0.0)
        h_ref[...] += jnp.sum(h, axis=(0, 1), keepdims=True)

        @pl.when(step == pl.num_programs(0) - 1)
        def _finalize():
            def bce(pos_ref, a_ref, b_ref, scale):
                pos = pos_ref[...]                         # (1, C) full-batch Σy
                neg = batch_total - pos                    # Σ(1-y) = B - Σy (linearity)
                # exact divide: runs once per call on a (1, C) vector in the epilogue
                pw = jnp.clip(neg / (pos + 1e-6), 1.0, 50.0)
                return -(jnp.sum(pw * a_ref[...]) + jnp.sum(b_ref[...])) * scale

            nar_loss = bce(pos_n_ref, a_n_ref, b_n_ref, bce_scale_n)
            sub_loss = bce(pos_s_ref, a_s_ref, b_s_ref, bce_scale_s)
            nar_focal = jnp.sum(f_n_ref[...]) * inv_bn
            sub_focal = jnp.sum(f_s_ref[...]) * inv_bs
            hierarchy = jnp.sum(h_ref[...]) * inv_b
            total = (nw * (nar_loss - 0.1 * nar_focal)
                     + sw * (sub_loss - 0.1 * sub_focal)
                     + hw * hierarchy)

            out_ref[0] = total
            out_ref[1] = nar_loss
            out_ref[2] = sub_loss
            out_ref[3] = hierarchy
            out_ref[4] = nar_focal
            out_ref[5] = sub_focal

    return loss_kernel


def narrative_classification_loss(narrative_logits, subnarrative_logits,
                                  narrative_labels, subnarrative_labels,
                                  narrative_weight=1.0, subnarrative_weight=1.0,
                                  hierarchy_weight=0.5, reduction="mean",
                                  batch_tile=None):
    """Pallas-backed forward pass of NarrativeClassificationLoss."""
    batch, num_nar = narrative_logits.shape
    batch_s, num_sub = subnarrative_logits.shape
    assert batch == batch_s
    assert narrative_labels.shape == (batch, num_nar)
    assert subnarrative_labels.shape == (batch, num_sub)

    tb = batch_tile if batch_tile is not None else _choose_batch_tile(batch)
    tb = min(int(tb), batch)
    n_blocks = pl.cdiv(batch, tb)

    kernel = _make_loss_kernel(num_nar, num_sub, batch, tb,
                               narrative_weight, subnarrative_weight,
                               hierarchy_weight, reduction)

    grid_spec = pltpu.PrefetchScalarGridSpec(
        num_scalar_prefetch=0,
        grid=(n_blocks,),
        in_specs=[
            pl.BlockSpec((tb, num_nar), lambda i: (i, 0)),
            pl.BlockSpec((tb, num_sub), lambda i: (i, 0)),
            pl.BlockSpec((tb, num_nar), lambda i: (i, 0)),
            pl.BlockSpec((tb, num_sub), lambda i: (i, 0)),
        ],
        out_specs=pl.BlockSpec((6,), lambda i: (0,),
                               memory_space=pltpu.MemorySpace.SMEM),
        scratch_shapes=[
            pltpu.VMEM((1, num_nar), jnp.float32),   # pos_n : Σ_b y
            pltpu.VMEM((1, num_nar), jnp.float32),   # a_n   : Σ_b y·logsig(x)
            pltpu.VMEM((1, 1), jnp.float32),         # b_n   : Σ (1-y)·logsig(-x)
            pltpu.VMEM((1, 1), jnp.float32),         # f_n   : Σ focal term
            pltpu.VMEM((1, num_sub), jnp.float32),   # pos_s
            pltpu.VMEM((1, num_sub), jnp.float32),   # a_s
            pltpu.VMEM((1, 1), jnp.float32),         # b_s
            pltpu.VMEM((1, 1), jnp.float32),         # f_s
            pltpu.VMEM((1, 1), jnp.float32),         # hierarchy sum
        ],
    )

    out = pl.pallas_call(
        kernel,
        out_shape=jax.ShapeDtypeStruct((6,), jnp.float32),
        grid_spec=grid_spec,
        compiler_params=pltpu.CompilerParams(
            dimension_semantics=("arbitrary",)),   # accumulators carry across steps
    )(narrative_logits, subnarrative_logits, narrative_labels, subnarrative_labels)

    total_loss = out[0]
    loss_dict = {
        "total_loss": out[0],
        "narrative_loss": out[1],
        "subnarrative_loss": out[2],
        "hierarchy_loss": out[3],
        "narrative_focal_term": out[4],
        "subnarrative_focal_term": out[5],
    }
    return total_loss, loss_dict


def _reference(nar_logits, sub_logits, nar_labels, sub_labels,
               nw=1.0, sw=1.0, hw=0.5):
    """Pure-JAX reference (mirrors the PyTorch module, reduction='mean')."""
    def bce_focal(x, y):
        x = x.astype(jnp.float32)
        y = y.astype(jnp.float32)
        pw = jnp.clip(jnp.sum(1.0 - y, 0) / (jnp.sum(y, 0) + 1e-6), 1.0, 50.0)
        lsp = jax.nn.log_sigmoid(x)
        lsn = jax.nn.log_sigmoid(-x)
        bce = jnp.mean(-(pw[None, :] * y * lsp + (1.0 - y) * lsn))
        p = jax.nn.sigmoid(x)
        focal = jnp.mean((1.0 - p) ** 2.0 * y * lsp)
        return bce, focal, p

    nl, nf, np_ = bce_focal(nar_logits, nar_labels)
    sl, sf, sp = bce_focal(sub_logits, sub_labels)
    hier = jnp.mean(jax.nn.relu(jnp.max(sp, 1) - jnp.max(np_, 1)))
    total = nw * (nl - 0.1 * nf) + sw * (sl - 0.1 * sf) + hw * hier
    return total, {
        "total_loss": total,
        "narrative_loss": nl,
        "subnarrative_loss": sl,
        "hierarchy_loss": hier,
        "narrative_focal_term": nf,
        "subnarrative_focal_term": sf,
    }


if __name__ == "__main__":
    key = jax.random.PRNGKey(0)
    k1, k2, k3, k4 = jax.random.split(key, 4)

    batch = 96
    num_narratives = 16
    num_subnarratives = 32

    # native-dtype inputs: bf16 logits, f32 {0,1} labels — no wrapper-side casts
    narrative_logits = jax.random.normal(
        k1, (batch, num_narratives), jnp.float32).astype(jnp.bfloat16)
    subnarrative_logits = jax.random.normal(
        k2, (batch, num_subnarratives), jnp.float32).astype(jnp.bfloat16)
    narrative_labels = (jax.random.uniform(
        k3, (batch, num_narratives)) > 0.7).astype(jnp.float32)
    subnarrative_labels = (jax.random.uniform(
        k4, (batch, num_subnarratives)) > 0.8).astype(jnp.float32)

    total_loss, loss_dict = narrative_classification_loss(
        narrative_logits, subnarrative_logits,
        narrative_labels, subnarrative_labels,
        batch_tile=32)                       # grid=(3,) -> exercises accumulation
    total_loss = jax.block_until_ready(total_loss)

    ref_total, ref_dict = _reference(
        narrative_logits, subnarrative_logits, narrative_labels, subnarrative_labels)
    ref_total = jax.block_until_ready(ref_total)

    assert jnp.allclose(total_loss, ref_total, rtol=3e-5, atol=1e-5), (
        total_loss, ref_total)
    for k in loss_dict:
        assert jnp.allclose(loss_dict[k], ref_dict[k], rtol=3e-5, atol=1e-5), (
            k, loss_dict[k], ref_dict[k])

    print("KERNEL_OK")
</pallas_src>

<mosaic_0001>
module attributes {stable_mosaic.version = 11 : i64} {
  func.func @loss_kernel(%arg0: i32, %arg1: memref<32x16xbf16, #tpu.memory_space<vmem>>, %arg2: memref<32x32xbf16, #tpu.memory_space<vmem>>, %arg3: memref<32x16xf32, #tpu.memory_space<vmem>>, %arg4: memref<32x32xf32, #tpu.memory_space<vmem>>, %arg5: memref<6xf32, #tpu.memory_space<smem>>, %arg6: memref<1x16xf32, #tpu.memory_space<vmem>>, %arg7: memref<1x16xf32, #tpu.memory_space<vmem>>, %arg8: memref<1x1xf32, #tpu.memory_space<vmem>>, %arg9: memref<1x1xf32, #tpu.memory_space<vmem>>, %arg10: memref<1x32xf32, #tpu.memory_space<vmem>>, %arg11: memref<1x32xf32, #tpu.memory_space<vmem>>, %arg12: memref<1x1xf32, #tpu.memory_space<vmem>>, %arg13: memref<1x1xf32, #tpu.memory_space<vmem>>, %arg14: memref<1x1xf32, #tpu.memory_space<vmem>>) attributes {dimension_semantics = [#tpu.dimension_semantics<arbitrary>], iteration_bounds = array<i64: 3>, scalar_prefetch = 0 : i64, scratch_operands = 9 : i64, tpu.core_type = #tpu.core_type<tc>, window_params = [{transform_indices = @transform_0, window_bounds = array<i64: 32, 16>}, {transform_indices = @transform_1, window_bounds = array<i64: 32, 32>}, {transform_indices = @transform_2, window_bounds = array<i64: 32, 16>}, {transform_indices = @transform_3, window_bounds = array<i64: 32, 32>}, {transform_indices = @transform_4, window_bounds = array<i64: 6>}]} {
    %c0_i32 = arith.constant 0 : i32
    %0 = arith.cmpi eq, %arg0, %c0_i32 : i32
    %1 = arith.extui %0 : i1 to i32
    %c0_i32_0 = arith.constant 0 : i32
    %2 = arith.cmpi ne, %1, %c0_i32_0 : i32
    scf.if %2 {
      %cst_64 = arith.constant 0.000000e+00 : f32
      %115 = vector.broadcast %cst_64 : f32 to vector<1x16xf32>
      %c0_65 = arith.constant 0 : index
      %c0_66 = arith.constant 0 : index
      %116 = vector.load %arg6[%c0_65, %c0_66] : memref<1x16xf32, #tpu.memory_space<vmem>>, vector<1x16xf32>
      tpu.vector_store %arg6[%c0_65, %c0_66], %115 {strides = array<i32>} : memref<1x16xf32, #tpu.memory_space<vmem>>, vector<1x16xf32>,
      %cst_67 = arith.constant 0.000000e+00 : f32
      %117 = vector.broadcast %cst_67 : f32 to vector<1x16xf32>
      %c0_68 = arith.constant 0 : index
      %c0_69 = arith.constant 0 : index
      %118 = vector.load %arg7[%c0_68, %c0_69] : memref<1x16xf32, #tpu.memory_space<vmem>>, vector<1x16xf32>
      tpu.vector_store %arg7[%c0_68, %c0_69], %117 {strides = array<i32>} : memref<1x16xf32, #tpu.memory_space<vmem>>, vector<1x16xf32>,
      %cst_70 = arith.constant 0.000000e+00 : f32
      %119 = vector.broadcast %cst_70 : f32 to vector<1x1xf32>
      %c0_71 = arith.constant 0 : index
      %c0_72 = arith.constant 0 : index
      %120 = vector.load %arg8[%c0_71, %c0_72] : memref<1x1xf32, #tpu.memory_space<vmem>>, vector<1x1xf32>
      tpu.vector_store %arg8[%c0_71, %c0_72], %119 {strides = array<i32>} : memref<1x1xf32, #tpu.memory_space<vmem>>, vector<1x1xf32>,
      %cst_73 = arith.constant 0.000000e+00 : f32
      %121 = vector.broadcast %cst_73 : f32 to vector<1x1xf32>
      %c0_74 = arith.constant 0 : index
      %c0_75 = arith.constant 0 : index
      %122 = vector.load %arg9[%c0_74, %c0_75] : memref<1x1xf32, #tpu.memory_space<vmem>>, vector<1x1xf32>
      tpu.vector_store %arg9[%c0_74, %c0_75], %121 {strides = array<i32>} : memref<1x1xf32, #tpu.memory_space<vmem>>, vector<1x1xf32>,
      %cst_76 = arith.constant 0.000000e+00 : f32
      %123 = vector.broadcast %cst_76 : f32 to vector<1x32xf32>
      %c0_77 = arith.constant 0 : index
      %c0_78 = arith.constant 0 : index
      %124 = vector.load %arg10[%c0_77, %c0_78] : memref<1x32xf32, #tpu.memory_space<vmem>>, vector<1x32xf32>
      tpu.vector_store %arg10[%c0_77, %c0_78], %123 {strides = array<i32>} : memref<1x32xf32, #tpu.memory_space<vmem>>, vector<1x32xf32>,
      %cst_79 = arith.constant 0.000000e+00 : f32
      %125 = vector.broadcast %cst_79 : f32 to vector<1x32xf32>
      %c0_80 = arith.constant 0 : index
      %c0_81 = arith.constant 0 : index
      %126 = vector.load %arg11[%c0_80, %c0_81] : memref<1x32xf32, #tpu.memory_space<vmem>>, vector<1x32xf32>
      tpu.vector_store %arg11[%c0_80, %c0_81], %125 {strides = array<i32>} : memref<1x32xf32, #tpu.memory_space<vmem>>, vector<1x32xf32>,
      %cst_82 = arith.constant 0.000000e+00 : f32
      %127 = vector.broadcast %cst_82 : f32 to vector<1x1xf32>
      %c0_83 = arith.constant 0 : index
      %c0_84 = arith.constant 0 : index
      %128 = vector.load %arg12[%c0_83, %c0_84] : memref<1x1xf32, #tpu.memory_space<vmem>>, vector<1x1xf32>
      tpu.vector_store %arg12[%c0_83, %c0_84], %127 {strides = array<i32>} : memref<1x1xf32, #tpu.memory_space<vmem>>, vector<1x1xf32>,
      %cst_85 = arith.constant 0.000000e+00 : f32
      %129 = vector.broadcast %cst_85 : f32 to vector<1x1xf32>
      %c0_86 = arith.constant 0 : index
      %c0_87 = arith.constant 0 : index
      %130 = vector.load %arg13[%c0_86, %c0_87] : memref<1x1xf32, #tpu.memory_space<vmem>>, vector<1x1xf32>
      tpu.vector_store %arg13[%c0_86, %c0_87], %129 {strides = array<i32>} : memref<1x1xf32, #tpu.memory_space<vmem>>, vector<1x1xf32>,
      %cst_88 = arith.constant 0.000000e+00 : f32
      %131 = vector.broadcast %cst_88 : f32 to vector<1x1xf32>
      %c0_89 = arith.constant 0 : index
      %c0_90 = arith.constant 0 : index
      %132 = vector.load %arg14[%c0_89, %c0_90] : memref<1x1xf32, #tpu.memory_space<vmem>>, vector<1x1xf32>
      tpu.vector_store %arg14[%c0_89, %c0_90], %131 {strides = array<i32>} : memref<1x1xf32, #tpu.memory_space<vmem>>, vector<1x1xf32>,
    } else {
    }
    %c0 = arith.constant 0 : index
    %c0_1 = arith.constant 0 : index
    %3 = vector.load %arg1[%c0, %c0_1] : memref<32x16xbf16, #tpu.memory_space<vmem>>, vector<32x16xbf16>
    %4 = arith.extf %3 : vector<32x16xbf16> to vector<32x16xf32>
    %c0_2 = arith.constant 0 : index
    %c0_3 = arith.constant 0 : index
    %5 = vector.load %arg3[%c0_2, %c0_3] : memref<32x16xf32, #tpu.memory_space<vmem>>, vector<32x16xf32>
    %cst = arith.constant 0.000000e+00 : f32
    %6 = vector.broadcast %cst : f32 to vector<32x16xf32>
    %7 = arith.minimumf %4, %6 : vector<32x16xf32>
    %8 = math.absf %4 : vector<32x16xf32>
    %cst_4 = arith.constant 0.000000e+00 : f32
    %9 = vector.broadcast %cst_4 : f32 to vector<32x16xf32>
    %10 = arith.subf %9, %8 : vector<32x16xf32>
    %11 = math.exp %10 : vector<32x16xf32>
    %12 = math.log1p %11 : vector<32x16xf32>
    %13 = arith.subf %7, %12 : vector<32x16xf32>
    %14 = arith.subf %13, %4 : vector<32x16xf32>
    %15 = math.exp %13 : vector<32x16xf32>
    %16 = arith.mulf %5, %13 : vector<32x16xf32>
    %cst_5 = arith.constant 1.000000e+00 : f32
    %17 = vector.broadcast %cst_5 : f32 to vector<32x16xf32>
    %18 = arith.subf %17, %5 : vector<32x16xf32>
    %19 = arith.mulf %18, %14 : vector<32x16xf32>
    %cst_6 = arith.constant 1.000000e+00 : f32
    %20 = vector.broadcast %cst_6 : f32 to vector<32x16xf32>
    %21 = arith.subf %20, %15 : vector<32x16xf32>
    %22 = arith.mulf %21, %21 : vector<32x16xf32>
    %23 = arith.mulf %22, %16 : vector<32x16xf32>
    %c0_7 = arith.constant 0 : index
    %c0_8 = arith.constant 0 : index
    %24 = vector.load %arg6[%c0_7, %c0_8] : memref<1x16xf32, #tpu.memory_space<vmem>>, vector<1x16xf32>
    %cst_9 = arith.constant dense<0.000000e+00> : vector<16xf32>
    %25 = vector.multi_reduction <add>, %5, %cst_9 [0] : vector<32x16xf32> to vector<16xf32>
    %26 = vector.shape_cast %25 : vector<16xf32> to vector<1x16xf32>
    %27 = arith.addf %24, %26 : vector<1x16xf32>
    %c0_10 = arith.constant 0 : index
    %c0_11 = arith.constant 0 : index
    %28 = vector.load %arg6[%c0_10, %c0_11] : memref<1x16xf32, #tpu.memory_space<vmem>>, vector<1x16xf32>
    tpu.vector_store %arg6[%c0_10, %c0_11], %27 {strides = array<i32>} : memref<1x16xf32, #tpu.memory_space<vmem>>, vector<1x16xf32>,
    %c0_12 = arith.constant 0 : index
    %c0_13 = arith.constant 0 : index
    %29 = vector.load %arg7[%c0_12, %c0_13] : memref<1x16xf32, #tpu.memory_space<vmem>>, vector<1x16xf32>
    %cst_14 = arith.constant dense<0.000000e+00> : vector<16xf32>
    %30 = vector.multi_reduction <add>, %16, %cst_14 [0] : vector<32x16xf32> to vector<16xf32>
    %31 = vector.shape_cast %30 : vector<16xf32> to vector<1x16xf32>
    %32 = arith.addf %29, %31 : vector<1x16xf32>
    %c0_15 = arith.constant 0 : index
    %c0_16 = arith.constant 0 : index
    %33 = vector.load %arg7[%c0_15, %c0_16] : memref<1x16xf32, #tpu.memory_space<vmem>>, vector<1x16xf32>
    tpu.vector_store %arg7[%c0_15, %c0_16], %32 {strides = array<i32>} : memref<1x16xf32, #tpu.memory_space<vmem>>, vector<1x16xf32>,
    %c0_17 = arith.constant 0 : index
    %c0_18 = arith.constant 0 : index
    %34 = vector.load %arg8[%c0_17, %c0_18] : memref<1x1xf32, #tpu.memory_space<vmem>>, vector<1x1xf32>
    %35 = vector.shape_cast %19 : vector<32x16xf32> to vector<1x32x16xf32>
    %cst_19 = arith.constant dense<0.000000e+00> : vector<1xf32>
    %36 = vector.multi_reduction <add>, %35, %cst_19 [1, 2] : vector<1x32x16xf32> to vector<1xf32>
    %37 = vector.shape_cast %36 : vector<1xf32> to vector<1x1x1xf32>
    %38 = vector.extract %37[0, 0, 0] : f32 from vector<1x1x1xf32>
    %39 = vector.broadcast %38 : f32 to vector<1x1xf32>
    %40 = arith.addf %34, %39 : vector<1x1xf32>
    %c0_20 = arith.constant 0 : index
    %c0_21 = arith.constant 0 : index
    %41 = vector.load %arg8[%c0_20, %c0_21] : memref<1x1xf32, #tpu.memory_space<vmem>>, vector<1x1xf32>
    tpu.vector_store %arg8[%c0_20, %c0_21], %40 {strides = array<i32>} : memref<1x1xf32, #tpu.memory_space<vmem>>, vector<1x1xf32>,
    %c0_22 = arith.constant 0 : index
    %c0_23 = arith.constant 0 : index
    %42 = vector.load %arg9[%c0_22, %c0_23] : memref<1x1xf32, #tpu.memory_space<vmem>>, vector<1x1xf32>
    %43 = vector.shape_cast %23 : vector<32x16xf32> to vector<1x32x16xf32>
    %cst_24 = arith.constant dense<0.000000e+00> : vector<1xf32>
    %44 = vector.multi_reduction <add>, %43, %cst_24 [1, 2] : vector<1x32x16xf32> to vector<1xf32>
    %45 = vector.shape_cast %44 : vector<1xf32> to vector<1x1x1xf32>
    %46 = vector.extract %45[0, 0, 0] : f32 from vector<1x1x1xf32>
    %47 = vector.broadcast %46 : f32 to vector<1x1xf32>
    %48 = arith.addf %42, %47 : vector<1x1xf32>
    %c0_25 = arith.constant 0 : index
    %c0_26 = arith.constant 0 : index
    %49 = vector.load %arg9[%c0_25, %c0_26] : memref<1x1xf32, #tpu.memory_space<vmem>>, vector<1x1xf32>
    tpu.vector_store %arg9[%c0_25, %c0_26], %48 {strides = array<i32>} : memref<1x1xf32, #tpu.memory_space<vmem>>, vector<1x1xf32>,
    %c0_27 = arith.constant 0 : index
    %c0_28 = arith.constant 0 : index
    %50 = vector.load %arg2[%c0_27, %c0_28] : memref<32x32xbf16, #tpu.memory_space<vmem>>, vector<32x32xbf16>
    %51 = arith.extf %50 : vector<32x32xbf16> to vector<32x32xf32>
    %c0_29 = arith.constant 0 : index
    %c0_30 = arith.constant 0 : index
    %52 = vector.load %arg4[%c0_29, %c0_30] : memref<32x32xf32, #tpu.memory_space<vmem>>, vector<32x32xf32>
    %cst_31 = arith.constant 0.000000e+00 : f32
    %53 = vector.broadcast %cst_31 : f32 to vector<32x32xf32>
    %54 = arith.minimumf %51, %53 : vector<32x32xf32>
    %55 = math.absf %51 : vector<32x32xf32>
    %cst_32 = arith.constant 0.000000e+00 : f32
    %56 = vector.broadcast %cst_32 : f32 to vector<32x32xf32>
    %57 = arith.subf %56, %55 : vector<32x32xf32>
    %58 = math.exp %57 : vector<32x32xf32>
    %59 = math.log1p %58 : vector<32x32xf32>
    %60 = arith.subf %54, %59 : vector<32x32xf32>
    %61 = arith.subf %60, %51 : vector<32x32xf32>
    %62 = math.exp %60 : vector<32x32xf32>
    %63 = arith.mulf %52, %60 : vector<32x32xf32>
    %cst_33 = arith.constant 1.000000e+00 : f32
    %64 = vector.broadcast %cst_33 : f32 to vector<32x32xf32>
    %65 = arith.subf %64, %52 : vector<32x32xf32>
    %66 = arith.mulf %65, %61 : vector<32x32xf32>
    %cst_34 = arith.constant 1.000000e+00 : f32
    %67 = vector.broadcast %cst_34 : f32 to vector<32x32xf32>
    %68 = arith.subf %67, %62 : vector<32x32xf32>
    %69 = arith.mulf %68, %68 : vector<32x32xf32>
    %70 = arith.mulf %69, %63 : vector<32x32xf32>
    %c0_35 = arith.constant 0 : index
    %c0_36 = arith.constant 0 : index
    %71 = vector.load %arg10[%c0_35, %c0_36] : memref<1x32xf32, #tpu.memory_space<vmem>>, vector<1x32xf32>
    %cst_37 = arith.constant dense<0.000000e+00> : vector<32xf32>
    %72 = vector.multi_reduction <add>, %52, %cst_37 [0] : vector<32x32xf32> to vector<32xf32>
    %73 = vector.shape_cast %72 : vector<32xf32> to vector<1x32xf32>
    %74 = arith.addf %71, %73 : vector<1x32xf32>
    %c0_38 = arith.constant 0 : index
    %c0_39 = arith.constant 0 : index
    %75 = vector.load %arg10[%c0_38, %c0_39] : memref<1x32xf32, #tpu.memory_space<vmem>>, vector<1x32xf32>
    tpu.vector_store %arg10[%c0_38, %c0_39], %74 {strides = array<i32>} : memref<1x32xf32, #tpu.memory_space<vmem>>, vector<1x32xf32>,
    %c0_40 = arith.constant 0 : index
    %c0_41 = arith.constant 0 : index
    %76 = vector.load %arg11[%c0_40, %c0_41] : memref<1x32xf32, #tpu.memory_space<vmem>>, vector<1x32xf32>
    %cst_42 = arith.constant dense<0.000000e+00> : vector<32xf32>
    %77 = vector.multi_reduction <add>, %63, %cst_42 [0] : vector<32x32xf32> to vector<32xf32>
    %78 = vector.shape_cast %77 : vector<32xf32> to vector<1x32xf32>
    %79 = arith.addf %76, %78 : vector<1x32xf32>
    %c0_43 = arith.constant 0 : index
    %c0_44 = arith.constant 0 : index
    %80 = vector.load %arg11[%c0_43, %c0_44] : memref<1x32xf32, #tpu.memory_space<vmem>>, vector<1x32xf32>
    tpu.vector_store %arg11[%c0_43, %c0_44], %79 {strides = array<i32>} : memref<1x32xf32, #tpu.memory_space<vmem>>, vector<1x32xf32>,
    %c0_45 = arith.constant 0 : index
    %c0_46 = arith.constant 0 : index
    %81 = vector.load %arg12[%c0_45, %c0_46] : memref<1x1xf32, #tpu.memory_space<vmem>>, vector<1x1xf32>
    %82 = vector.shape_cast %66 : vector<32x32xf32> to vector<1x32x32xf32>
    %cst_47 = arith.constant dense<0.000000e+00> : vector<1xf32>
    %83 = vector.multi_reduction <add>, %82, %cst_47 [1, 2] : vector<1x32x32xf32> to vector<1xf32>
    %84 = vector.shape_cast %83 : vector<1xf32> to vector<1x1x1xf32>
    %85 = vector.extract %84[0, 0, 0] : f32 from vector<1x1x1xf32>
    %86 = vector.broadcast %85 : f32 to vector<1x1xf32>
    %87 = arith.addf %81, %86 : vector<1x1xf32>
    %c0_48 = arith.constant 0 : index
    %c0_49 = arith.constant 0 : index
    %88 = vector.load %arg12[%c0_48, %c0_49] : memref<1x1xf32, #tpu.memory_space<vmem>>, vector<1x1xf32>
    tpu.vector_store %arg12[%c0_48, %c0_49], %87 {strides = array<i32>} : memref<1x1xf32, #tpu.memory_space<vmem>>, vector<1x1xf32>,
    %c0_50 = arith.constant 0 : index
    %c0_51 = arith.constant 0 : index
    %89 = vector.load %arg13[%c0_50, %c0_51] : memref<1x1xf32, #tpu.memory_space<vmem>>, vector<1x1xf32>
    %90 = vector.shape_cast %70 : vector<32x32xf32> to vector<1x32x32xf32>
    %cst_52 = arith.constant dense<0.000000e+00> : vector<1xf32>
    %91 = vector.multi_reduction <add>, %90, %cst_52 [1, 2] : vector<1x32x32xf32> to vector<1xf32>
    %92 = vector.shape_cast %91 : vector<1xf32> to vector<1x1x1xf32>
    %93 = vector.extract %92[0, 0, 0] : f32 from vector<1x1x1xf32>
    %94 = vector.broadcast %93 : f32 to vector<1x1xf32>
    %95 = arith.addf %89, %94 : vector<1x1xf32>
    %c0_53 = arith.constant 0 : index
    %c0_54 = arith.constant 0 : index
    %96 = vector.load %arg13[%c0_53, %c0_54] : memref<1x1xf32, #tpu.memory_space<vmem>>, vector<1x1xf32>
    tpu.vector_store %arg13[%c0_53, %c0_54], %95 {strides = array<i32>} : memref<1x1xf32, #tpu.memory_space<vmem>>, vector<1x1xf32>,
    %cst_55 = arith.constant dense<0xFF800000> : vector<32xf32>
    %97 = vector.multi_reduction <maximumf>, %62, %cst_55 [1] : vector<32x32xf32> to vector<32xf32>
    %98 = vector.shape_cast %97 : vector<32xf32> to vector<32x1xf32>
    %cst_56 = arith.constant dense<0xFF800000> : vector<32xf32>
    %99 = vector.multi_reduction <maximumf>, %15, %cst_56 [1] : vector<32x16xf32> to vector<32xf32>
    %100 = vector.shape_cast %99 : vector<32xf32> to vector<32x1xf32>
    %101 = arith.subf %98, %100 : vector<32x1xf32>
    %cst_57 = arith.constant 0.000000e+00 : f32
    %102 = vector.broadcast %cst_57 : f32 to vector<32x1xf32>
    %103 = arith.maximumf %101, %102 : vector<32x1xf32>
    %c0_58 = arith.constant 0 : index
    %c0_59 = arith.constant 0 : index
    %104 = vector.load %arg14[%c0_58, %c0_59] : memref<1x1xf32, #tpu.memory_space<vmem>>, vector<1x1xf32>
    %105 = vector.shape_cast %103 : vector<32x1xf32> to vector<1x32x1xf32>
    %cst_60 = arith.constant dense<0.000000e+00> : vector<1xf32>
    %106 = vector.multi_reduction <add>, %105, %cst_60 [1, 2] : vector<1x32x1xf32> to vector<1xf32>
    %107 = vector.shape_cast %106 : vector<1xf32> to vector<1x1x1xf32>
    %108 = vector.extract %107[0, 0, 0] : f32 from vector<1x1x1xf32>
    %109 = vector.broadcast %108 : f32 to vector<1x1xf32>
    %110 = arith.addf %104, %109 : vector<1x1xf32>
    %c0_61 = arith.constant 0 : index
    %c0_62 = arith.constant 0 : index
    %111 = vector.load %arg14[%c0_61, %c0_62] : memref<1x1xf32, #tpu.memory_space<vmem>>, vector<1x1xf32>
    tpu.vector_store %arg14[%c0_61, %c0_62], %110 {strides = array<i32>} : memref<1x1xf32, #tpu.memory_space<vmem>>, vector<1x1xf32>,
    %c2_i32 = arith.constant 2 : i32
    %112 = arith.cmpi eq, %arg0, %c2_i32 : i32
    %113 = arith.extui %112 : i1 to i32
    %c0_i32_63 = arith.constant 0 : i32
    %114 = arith.cmpi ne, %113, %c0_i32_63 : i32
    scf.if %114 {
      %c0_64 = arith.constant 0 : index
      %c0_65 = arith.constant 0 : index
      %115 = vector.load %arg6[%c0_64, %c0_65] : memref<1x16xf32, #tpu.memory_space<vmem>>, vector<1x16xf32>
      %cst_66 = arith.constant 9.600000e+01 : f32
      %116 = vector.broadcast %cst_66 : f32 to vector<1x16xf32>
      %117 = arith.subf %116, %115 : vector<1x16xf32>
      %cst_67 = arith.constant 9.99999997E-7 : f32
      %118 = vector.broadcast %cst_67 : f32 to vector<1x16xf32>
      %119 = arith.addf %115, %118 : vector<1x16xf32>
      %120 = arith.divf %117, %119 : vector<1x16xf32>
      %cst_68 = arith.constant 1.000000e+00 : f32
      %cst_69 = arith.constant 5.000000e+01 : f32
      %121 = vector.broadcast %cst_68 : f32 to vector<1x16xf32>
      %122 = arith.maximumf %121, %120 : vector<1x16xf32>
      %123 = vector.broadcast %cst_69 : f32 to vector<1x16xf32>
      %124 = arith.minimumf %123, %122 : vector<1x16xf32>
      %c0_70 = arith.constant 0 : index
      %c0_71 = arith.constant 0 : index
      %125 = vector.load %arg7[%c0_70, %c0_71] : memref<1x16xf32, #tpu.memory_space<vmem>>, vector<1x16xf32>
      %126 = arith.mulf %124, %125 : vector<1x16xf32>
      %127 = vector.shape_cast %126 : vector<1x16xf32> to vector<1x1x16xf32>
      %cst_72 = arith.constant dense<0.000000e+00> : vector<1xf32>
      %128 = vector.multi_reduction <add>, %127, %cst_72 [1, 2] : vector<1x1x16xf32> to vector<1xf32>
      %129 = vector.shape_cast %128 : vector<1xf32> to vector<1x1x1xf32>
      %130 = vector.extract %129[0, 0, 0] : f32 from vector<1x1x1xf32>
      %c0_73 = arith.constant 0 : index
      %c0_74 = arith.constant 0 : index
      %131 = vector.load %arg8[%c0_73, %c0_74] : memref<1x1xf32, #tpu.memory_space<vmem>>, vector<1x1xf32>
      %132 = vector.shape_cast %131 : vector<1x1xf32> to vector<1x1x1xf32>
      %cst_75 = arith.constant dense<0.000000e+00> : vector<1xf32>
      %133 = vector.multi_reduction <add>, %132, %cst_75 [1, 2] : vector<1x1x1xf32> to vector<1xf32>
      %134 = vector.shape_cast %133 : vector<1xf32> to vector<1x1x1xf32>
      %135 = vector.extract %134[0, 0, 0] : f32 from vector<1x1x1xf32>
      %136 = arith.addf %130, %135 : f32
      %cst_76 = arith.constant 0.000000e+00 : f32
      %137 = arith.subf %cst_76, %136 : f32
      %cst_77 = arith.constant 6.51041686E-4 : f32
      %138 = arith.mulf %137, %cst_77 : f32
      %c0_78 = arith.constant 0 : index
      %c0_79 = arith.constant 0 : index
      %139 = vector.load %arg10[%c0_78, %c0_79] : memref<1x32xf32, #tpu.memory_space<vmem>>, vector<1x32xf32>
      %cst_80 = arith.constant 9.600000e+01 : f32
      %140 = vector.broadcast %cst_80 : f32 to vector<1x32xf32>
      %141 = arith.subf %140, %139 : vector<1x32xf32>
      %cst_81 = arith.constant 9.99999997E-7 : f32
      %142 = vector.broadcast %cst_81 : f32 to vector<1x32xf32>
      %143 = arith.addf %139, %142 : vector<1x32xf32>
      %144 = arith.divf %141, %143 : vector<1x32xf32>
      %cst_82 = arith.constant 1.000000e+00 : f32
      %cst_83 = arith.constant 5.000000e+01 : f32
      %145 = vector.broadcast %cst_82 : f32 to vector<1x32xf32>
      %146 = arith.maximumf %145, %144 : vector<1x32xf32>
      %147 = vector.broadcast %cst_83 : f32 to vector<1x32xf32>
      %148 = arith.minimumf %147, %146 : vector<1x32xf32>
      %c0_84 = arith.constant 0 : index
      %c0_85 = arith.constant 0 : index
      %149 = vector.load %arg11[%c0_84, %c0_85] : memref<1x32xf32, #tpu.memory_space<vmem>>, vector<1x32xf32>
      %150 = arith.mulf %148, %149 : vector<1x32xf32>
      %151 = vector.shape_cast %150 : vector<1x32xf32> to vector<1x1x32xf32>
      %cst_86 = arith.constant dense<0.000000e+00> : vector<1xf32>
      %152 = vector.multi_reduction <add>, %151, %cst_86 [1, 2] : vector<1x1x32xf32> to vector<1xf32>
      %153 = vector.shape_cast %152 : vector<1xf32> to vector<1x1x1xf32>
      %154 = vector.extract %153[0, 0, 0] : f32 from vector<1x1x1xf32>
      %c0_87 = arith.constant 0 : index
      %c0_88 = arith.constant 0 : index
      %155 = vector.load %arg12[%c0_87, %c0_88] : memref<1x1xf32, #tpu.memory_space<vmem>>, vector<1x1xf32>
      %156 = vector.shape_cast %155 : vector<1x1xf32> to vector<1x1x1xf32>
      %cst_89 = arith.constant dense<0.000000e+00> : vector<1xf32>
      %157 = vector.multi_reduction <add>, %156, %cst_89 [1, 2] : vector<1x1x1xf32> to vector<1xf32>
      %158 = vector.shape_cast %157 : vector<1xf32> to vector<1x1x1xf32>
      %159 = vector.extract %158[0, 0, 0] : f32 from vector<1x1x1xf32>
      %160 = arith.addf %154, %159 : f32
      %cst_90 = arith.constant 0.000000e+00 : f32
      %161 = arith.subf %cst_90, %160 : f32
      %cst_91 = arith.constant 3.25520843E-4 : f32
      %162 = arith.mulf %161, %cst_91 : f32
      %c0_92 = arith.constant 0 : index
      %c0_93 = arith.constant 0 : index
      %163 = vector.load %arg9[%c0_92, %c0_93] : memref<1x1xf32, #tpu.memory_space<vmem>>, vector<1x1xf32>
      %164 = vector.shape_cast %163 : vector<1x1xf32> to vector<1x1x1xf32>
      %cst_94 = arith.constant dense<0.000000e+00> : vector<1xf32>
      %165 = vector.multi_reduction <add>, %164, %cst_94 [1, 2] : vector<1x1x1xf32> to vector<1xf32>
      %166 = vector.shape_cast %165 : vector<1xf32> to vector<1x1x1xf32>
      %167 = vector.extract %166[0, 0, 0] : f32 from vector<1x1x1xf32>
      %cst_95 = arith.constant 6.51041686E-4 : f32
      %168 = arith.mulf %167, %cst_95 : f32
      %c0_96 = arith.constant 0 : index
      %c0_97 = arith.constant 0 : index
      %169 = vector.load %arg13[%c0_96, %c0_97] : memref<1x1xf32, #tpu.memory_space<vmem>>, vector<1x1xf32>
      %170 = vector.shape_cast %169 : vector<1x1xf32> to vector<1x1x1xf32>
      %cst_98 = arith.constant dense<0.000000e+00> : vector<1xf32>
      %171 = vector.multi_reduction <add>, %170, %cst_98 [1, 2] : vector<1x1x1xf32> to vector<1xf32>
      %172 = vector.shape_cast %171 : vector<1xf32> to vector<1x1x1xf32>
      %173 = vector.extract %172[0, 0, 0] : f32 from vector<1x1x1xf32>
      %cst_99 = arith.constant 3.25520843E-4 : f32
      %174 = arith.mulf %173, %cst_99 : f32
      %c0_100 = arith.constant 0 : index
      %c0_101 = arith.constant 0 : index
      %175 = vector.load %arg14[%c0_100, %c0_101] : memref<1x1xf32, #tpu.memory_space<vmem>>, vector<1x1xf32>
      %176 = vector.shape_cast %175 : vector<1x1xf32> to vector<1x1x1xf32>
      %cst_102 = arith.constant dense<0.000000e+00> : vector<1xf32>
      %177 = vector.multi_reduction <add>, %176, %cst_102 [1, 2] : vector<1x1x1xf32> to vector<1xf32>
      %178 = vector.shape_cast %177 : vector<1xf32> to vector<1x1x1xf32>
      %179 = vector.extract %178[0, 0, 0] : f32 from vector<1x1x1xf32>
      %cst_103 = arith.constant 0.010416667 : f32
      %180 = arith.mulf %179, %cst_103 : f32
      %cst_104 = arith.constant 1.000000e-01 : f32
      %181 = arith.mulf %cst_104, %168 : f32
      %182 = arith.subf %138, %181 : f32
      %cst_105 = arith.constant 1.000000e+00 : f32
      %183 = arith.mulf %cst_105, %182 : f32
      %cst_106 = arith.constant 1.000000e-01 : f32
      %184 = arith.mulf %cst_106, %174 : f32
      %185 = arith.subf %162, %184 : f32
      %cst_107 = arith.constant 1.000000e+00 : f32
      %186 = arith.mulf %cst_107, %185 : f32
      %187 = arith.addf %183, %186 : f32
      %cst_108 = arith.constant 5.000000e-01 : f32
      %188 = arith.mulf %cst_108, %180 : f32
      %189 = arith.addf %187, %188 : f32
      %c0_109 = arith.constant 0 : index
      %190 = memref.load %arg5[%c0_109] : memref<6xf32, #tpu.memory_space<smem>>
      memref.store %189, %arg5[%c0_109] : memref<6xf32, #tpu.memory_space<smem>>
      %c1 = arith.constant 1 : index
      %191 = memref.load %arg5[%c1] : memref<6xf32, #tpu.memory_space<smem>>
      memref.store %138, %arg5[%c1] : memref<6xf32, #tpu.memory_space<smem>>
      %c2 = arith.constant 2 : index
      %192 = memref.load %arg5[%c2] : memref<6xf32, #tpu.memory_space<smem>>
      memref.store %162, %arg5[%c2] : memref<6xf32, #tpu.memory_space<smem>>
      %c3 = arith.constant 3 : index
      %193 = memref.load %arg5[%c3] : memref<6xf32, #tpu.memory_space<smem>>
      memref.store %180, %arg5[%c3] : memref<6xf32, #tpu.memory_space<smem>>
      %c4 = arith.constant 4 : index
      %194 = memref.load %arg5[%c4] : memref<6xf32, #tpu.memory_space<smem>>
      memref.store %168, %arg5[%c4] : memref<6xf32, #tpu.memory_space<smem>>
      %c5 = arith.constant 5 : index
      %195 = memref.load %arg5[%c5] : memref<6xf32, #tpu.memory_space<smem>>
      memref.store %174, %arg5[%c5] : memref<6xf32, #tpu.memory_space<smem>>
    } else {
    }
    return
  }
  func.func @transform_0(%arg0: i32) -> (i32, i32) {
    %c0_i32 = arith.constant 0 : i32
    %c0_i32_0 = arith.constant 0 : i32
    return %arg0, %c0_i32 : i32, i32
  }
  func.func @transform_1(%arg0: i32) -> (i32, i32) {
    %c0_i32 = arith.constant 0 : i32
    %c0_i32_0 = arith.constant 0 : i32
    return %arg0, %c0_i32 : i32, i32
  }
  func.func @transform_2(%arg0: i32) -> (i32, i32) {
    %c0_i32 = arith.constant 0 : i32
    %c0_i32_0 = arith.constant 0 : i32
    return %arg0, %c0_i32 : i32, i32
  }
  func.func @transform_3(%arg0: i32) -> (i32, i32) {
    %c0_i32 = arith.constant 0 : i32
    %c0_i32_0 = arith.constant 0 : i32
    return %arg0, %c0_i32 : i32, i32
  }
  func.func @transform_4(%arg0: i32) -> i32 {
    %c0_i32 = arith.constant 0 : i32
    %c0_i32_0 = arith.constant 0 : i32
    return %c0_i32 : i32
  }
}

</mosaic_0001>

<llo_original>
// kernel: tpu_custom_call.1
$region0: #{tpu_custom_call.1}
  #allocation0 [shape = 'u32[]', space=smem, size = 0x4, offset = 0x4, fixed_abs, tag = 'smem constant byte address 0x4 - core index']
  #allocation1 [shape = 'u32[144,128]{1,0:T(1,128)}', space=vmem, size = 0x12000, scoped, tag = 'internal scratch']
  #allocation2 [shape = 'f32[1,16]{1,0:T(1,128)}', space=vmem, size = 0x200, scoped, tag = 'scratch operand']
  #allocation3 [shape = 'f32[1,16]{1,0:T(1,128)}', space=vmem, size = 0x200, scoped, tag = 'scratch operand']
  #allocation4 [shape = 'f32[1,1]{1,0:T(1,128)}', space=vmem, size = 0x200, scoped, tag = 'scratch operand']
  #allocation5 [shape = 'f32[1,1]{1,0:T(1,128)}', space=vmem, size = 0x200, scoped, tag = 'scratch operand']
  #allocation6 [shape = 'f32[1,32]{1,0:T(1,128)}', space=vmem, size = 0x200, scoped, tag = 'scratch operand']
  #allocation7 [shape = 'f32[1,32]{1,0:T(1,128)}', space=vmem, size = 0x200, scoped, tag = 'scratch operand']
  #allocation8 [shape = 'f32[1,1]{1,0:T(1,128)}', space=vmem, size = 0x200, scoped, tag = 'scratch operand']
  #allocation9 [shape = 'f32[1,1]{1,0:T(1,128)}', space=vmem, size = 0x200, scoped, tag = 'scratch operand']
  #allocation10 [shape = 'f32[1,1]{1,0:T(1,128)}', space=vmem, size = 0x200, scoped, tag = 'scratch operand']
  %s0 = inlined_call_operand.vmem [shape: bf16[96,16], index: 0, kind: input, shape index: {}]
  %s1 = inlined_call_operand.vmem [shape: bf16[96,32], index: 1, kind: input, shape index: {}]
  %s2 = inlined_call_operand.vmem [shape: f32[96,16], index: 2, kind: input, shape index: {}]
  %s3 = inlined_call_operand.vmem [shape: f32[96,32], index: 3, kind: input, shape index: {}]
  %s4 = inlined_call_operand.hbm [shape: f32[6], index: 4, kind: output, shape index: {}]
  %s5 = sld [smem:[#allocation0]]
  $region57: #{tpu_custom_call.1} parent=0
    _
  %s7 = ssub.s32 1, %s5
  %s8 = scalar_select 0, %s7, %s5
  $region1: #{tpu_custom_call.1} parent=0
    #allocation11 [shape = 'u8[512]{0}', space=smem, size = 0x200, scoped, tag = 'output window, operand 0, single buffered']
    #allocation12 [shape = 's32[2]{0}', space=sflag, size = 0x8, scoped, tag = 'scoped memory for tpu_custom_call.1']
    %9 = vsyncpa [#allocation12], 0
    loop: start=0, step=1, limit=5
    $region2: #{tpu_custom_call.1} parent=1 // loop_pre_header
      _
    $region3: #{tpu_custom_call.1} parent=1 // loop_header
      %s11 = sphi 0, %s15
      %p12 = scmp.ge.s32.totalorder %s11, 5
      %s21 = sphi 0, %s23
      %s24 = sphi 0, %s21
      %s25 = sphi 0, %s24
      %s41 = sphi 0, %s25
      %s47 = sphi 0, %s49
      %s50 = sphi 0, %s47
      %s51 = sphi 0, %s50
      %s67 = sphi 0, %s51
      %s73 = sphi 0, %s75
      %s76 = sphi 0, %s73
      %s77 = sphi 0, %s76
      %s93 = sphi 0, %s77
      %s99 = sphi 0, %s101
      %s102 = sphi 0, %s99
      %s103 = sphi 0, %s102
      %s119 = sphi 0, %s103
      %s123 = sphi 0, %s123
      %s125 = sphi 0, %s123
      %s126 = sphi 0, %s125
      %s140 = sphi 0, %s126
    $region4: #{tpu_custom_call.1} parent=1 // loop_header_branch
      %14 = sbr.rel (%p12) target = $region8
    $region5: #{tpu_custom_call.1} parent=1 // loop_body
      %s16 = ssub.s32 %s11, 1
      %s17 = ssub.s32 %s11, 2
      %s18 = sadd.s32 %s11, 1
      %s19 = ssub.s32 %s11, %s18
      %p20 = scmp.eq.s32.totalorder %s19, 0
      %s22 = sadd.s32 %s21, 1
      %s23 = scalar_select %p20, %s21, %s22
      %p26 = pneg %p20
      %p27 = scmp.eq.s32.totalorder %s11, 2
      %p28 = por %p26, %p27
      %p29 = scmp.ne.s32.totalorder %s21, %s24
      %p30 = scmp.eq.s32.totalorder %s11, 0
      %p31 = por %p29, %p30
      %p32 = scmp.ne.s32.totalorder %s21, %s24
      %p33 = scmp.eq.s32.totalorder %s16, 2
      %p34 = por %p32, %p33
      %p35 = scmp.ne.s32.totalorder %s24, %s25
      %p36 = scmp.eq.s32.totalorder %s16, 0
      %p37 = por %p35, %p36
      %p38 = scmp.ne.s32.totalorder %s24, %s25
      %p39 = scmp.eq.s32.totalorder %s17, 2
      %p40 = por %p38, %p39
      %p42 = scmp.ne.s32.totalorder %s25, %s41
      %p43 = scmp.eq.s32.totalorder %s17, 0
      %p44 = por %p42, %p43
      %s45 = ssub.s32 %s11, %s18
      %p46 = scmp.eq.s32.totalorder %s45, 0
      %s48 = sadd.s32 %s47, 1
      %s49 = scalar_select %p46, %s47, %s48
      %p52 = pneg %p46
      %p53 = scmp.eq.s32.totalorder %s11, 2
      %p54 = por %p52, %p53
      %p55 = scmp.ne.s32.totalorder %s47, %s50
      %p56 = scmp.eq.s32.totalorder %s11, 0
      %p57 = por %p55, %p56
      %p58 = scmp.ne.s32.totalorder %s47, %s50
      %p59 = scmp.eq.s32.totalorder %s16, 2
      %p60 = por %p58, %p59
      %p61 = scmp.ne.s32.totalorder %s50, %s51
      %p62 = scmp.eq.s32.totalorder %s16, 0
      %p63 = por %p61, %p62
      %p64 = scmp.ne.s32.totalorder %s50, %s51
      %p65 = scmp.eq.s32.totalorder %s17, 2
      %p66 = por %p64, %p65
      %p68 = scmp.ne.s32.totalorder %s51, %s67
      %p69 = scmp.eq.s32.totalorder %s17, 0
      %p70 = por %p68, %p69
      %s71 = ssub.s32 %s11, %s18
      %p72 = scmp.eq.s32.totalorder %s71, 0
      %s74 = sadd.s32 %s73, 1
      %s75 = scalar_select %p72, %s73, %s74
      %p78 = pneg %p72
      %p79 = scmp.eq.s32.totalorder %s11, 2
      %p80 = por %p78, %p79
      %p81 = scmp.ne.s32.totalorder %s73, %s76
      %p82 = scmp.eq.s32.totalorder %s11, 0
      %p83 = por %p81, %p82
      %p84 = scmp.ne.s32.totalorder %s73, %s76
      %p85 = scmp.eq.s32.totalorder %s16, 2
      %p86 = por %p84, %p85
      %p87 = scmp.ne.s32.totalorder %s76, %s77
      %p88 = scmp.eq.s32.totalorder %s16, 0
      %p89 = por %p87, %p88
      %p90 = scmp.ne.s32.totalorder %s76, %s77
      %p91 = scmp.eq.s32.totalorder %s17, 2
      %p92 = por %p90, %p91
      %p94 = scmp.ne.s32.totalorder %s77, %s93
      %p95 = scmp.eq.s32.totalorder %s17, 0
      %p96 = por %p94, %p95
      %s97 = ssub.s32 %s11, %s18
      %p98 = scmp.eq.s32.totalorder %s97, 0
      %s100 = sadd.s32 %s99, 1
      %s101 = scalar_select %p98, %s99, %s100
      %p104 = pneg %p98
      %p105 = scmp.eq.s32.totalorder %s11, 2
      %p106 = por %p104, %p105
      %p107 = scmp.ne.s32.totalorder %s99, %s102
      %p108 = scmp.eq.s32.totalorder %s11, 0
      %p109 = por %p107, %p108
      %p110 = scmp.ne.s32.totalorder %s99, %s102
      %p111 = scmp.eq.s32.totalorder %s16, 2
      %p112 = por %p110, %p111
      %p113 = scmp.ne.s32.totalorder %s102, %s103
      %p114 = scmp.eq.s32.totalorder %s16, 0
      %p115 = por %p113, %p114
      %p116 = scmp.ne.s32.totalorder %s102, %s103
      %p117 = scmp.eq.s32.totalorder %s17, 2
      %p118 = por %p116, %p117
      %p120 = scmp.ne.s32.totalorder %s103, %s119
      %p121 = scmp.eq.s32.totalorder %s17, 0
      %p122 = por %p120, %p121
      %s124 = sadd.s32 %s123, 1
      %p127 = scmp.eq.s32.totalorder %s11, 2
      %p128 = scmp.ne.s32.totalorder %s123, %s125
      %p129 = scmp.eq.s32.totalorder %s11, 0
      %p130 = por %p128, %p129
      %p131 = scmp.ne.s32.totalorder %s123, %s125
      %p132 = scmp.eq.s32.totalorder %s16, 2
      %p133 = por %p131, %p132
      %p134 = scmp.ne.s32.totalorder %s125, %s126
      %p135 = scmp.eq.s32.totalorder %s16, 0
      %p136 = por %p134, %p135
      %p137 = scmp.ne.s32.totalorder %s125, %s126
      %p138 = scmp.eq.s32.totalorder %s17, 2
      %p139 = por %p137, %p138
      %p141 = scmp.ne.s32.totalorder %s126, %s140
      %p142 = scmp.eq.s32.totalorder %s17, 0
      %p143 = por %p141, %p142
      %p144 = scmp.le.s32.totalorder 1, %s11
      %p145 = scmp.lt.s32.totalorder %s11, 4
      %p146 = pnand %p144, %p145
      %p147 = pneg %p146
      // Predicated region
      $region9: #{tpu_custom_call.1} parent=5 // pred_check
        _
      $region10: #{tpu_custom_call.1} parent=5 // pred_check_branch
        %149 = sbr.rel (%p146) target = $region12
      $region11: #{tpu_custom_call.1} parent=5 // pred_region
        %s150 = ssub.s32 %s11, 1
      $region12: #{tpu_custom_call.1} parent=5 // pred_fallthru
        _
      %p151 = scmp.lt.s32.totalorder %s11, 3
      // Predicated region
      $region13: #{tpu_custom_call.1} parent=5 // pred_check
        %p152 = pneg %p151
      $region14: #{tpu_custom_call.1} parent=5 // pred_check_branch
        %154 = sbr.rel (%p152) target = $region16
      $region15: #{tpu_custom_call.1} parent=5 // pred_region
        // Predicated region
        $region17: #{tpu_custom_call.1} parent=15 // pred_check
          %p155 = pneg %p31
        $region18: #{tpu_custom_call.1} parent=15 // pred_check_branch
          %157 = sbr.rel (%p155) target = $region20
        $region19: #{tpu_custom_call.1} parent=15 // pred_region
          %s158 = smul.u32 4, %s11
          %p159 = scmp.lt.s32.totalorder %s158, 11
          %s160 = scalar_select %p159, %s158, 11
          %s161 = smul.addr %s160, 4
          %s162 = scalar_lea.vmem %s0, %s161
          %s163 = smul.u32 4, %s11
        $region20: #{tpu_custom_call.1} parent=15 // pred_fallthru
          _
        // Predicated region
        $region21: #{tpu_custom_call.1} parent=15 // pred_check
          %p164 = pneg %p57
        $region22: #{tpu_custom_call.1} parent=15 // pred_check_branch
          %166 = sbr.rel (%p164) target = $region24
        $region23: #{tpu_custom_call.1} parent=15 // pred_region
          %s167 = smul.u32 4, %s11
          %p168 = scmp.lt.s32.totalorder %s167, 11
          %s169 = scalar_select %p168, %s167, 11
          %s170 = smul.addr %s169, 4
          %s171 = scalar_lea.vmem %s1, %s170
          %s172 = smul.u32 4, %s11
        $region24: #{tpu_custom_call.1} parent=15 // pred_fallthru
          _
        // Predicated region
        $region25: #{tpu_custom_call.1} parent=15 // pred_check
          %p173 = pneg %p83
        $region26: #{tpu_custom_call.1} parent=15 // pred_check_branch
          %175 = sbr.rel (%p173) target = $region28
        $region27: #{tpu_custom_call.1} parent=15 // pred_region
          %s176 = smul.u32 4, %s11
          %p177 = scmp.lt.s32.totalorder %s176, 11
          %s178 = scalar_select %p177, %s176, 11
          %s179 = smul.addr %s178, 8
          %s180 = scalar_lea.vmem %s2, %s179
          %s181 = smul.u32 4, %s11
        $region28: #{tpu_custom_call.1} parent=15 // pred_fallthru
          _
        // Predicated region
        $region29: #{tpu_custom_call.1} parent=15 // pred_check
          %p182 = pneg %p109
        $region30: #{tpu_custom_call.1} parent=15 // pred_check_branch
          %184 = sbr.rel (%p182) target = $region32
        $region31: #{tpu_custom_call.1} parent=15 // pred_region
          %s185 = smul.u32 4, %s11
          %p186 = scmp.lt.s32.totalorder %s185, 11
          %s187 = scalar_select %p186, %s185, 11
          %s188 = smul.addr %s187, 8
          %s189 = scalar_lea.vmem %s3, %s188
          %s190 = smul.u32 4, %s11
        $region32: #{tpu_custom_call.1} parent=15 // pred_fallthru
          _
      $region16: #{tpu_custom_call.1} parent=5 // pred_fallthru
        _
      %p191 = scmp.le.s32.totalorder 1, %s11
      %p192 = scmp.lt.s32.totalorder %s11, 4
      %p193 = pnand %p191, %p192
      %p194 = pneg %p193
      // Predicated region
      $region33: #{tpu_custom_call.1} parent=5 // pred_check
        _
      $region34: #{tpu_custom_call.1} parent=5 // pred_check_branch
        %196 = sbr.rel (%p193) target = $region36
      $region35: #{tpu_custom_call.1} parent=5 // pred_region
        %s197 = ssub.s32 %s11, 1
        %s198 = smul.u32 4, %s16
        %p199 = scmp.lt.s32.totalorder %s198, 11
        %s200 = scalar_select %p199, %s198, 11
        %s201 = smul.addr %s200, 4
        %s202 = scalar_lea.vmem %s0, %s201
        %p203 = pneg %p37
        %p204 = pneg %p34
        %s205 = smul.u32 4, %s16
        %p206 = scmp.lt.s32.totalorder %s205, 11
        %s207 = scalar_select %p206, %s205, 11
        %s208 = smul.addr %s207, 4
        %s209 = scalar_lea.vmem %s1, %s208
        %p210 = pneg %p63
        %p211 = pneg %p60
        %s212 = smul.u32 4, %s16
        %p213 = scmp.lt.s32.totalorder %s212, 11
        %s214 = scalar_select %p213, %s212, 11
        %s215 = smul.addr %s214, 8
        %s216 = scalar_lea.vmem %s2, %s215
        %p217 = pneg %p89
        %p218 = pneg %p86
        %s219 = smul.u32 4, %s16
        %p220 = scmp.lt.s32.totalorder %s219, 11
        %s221 = scalar_select %p220, %s219, 11
        %s222 = smul.addr %s221, 8
        %s223 = scalar_lea.vmem %s3, %s222
        %p224 = pneg %p115
        %p225 = pneg %p112
        %p226 = pneg %p136
        %p227 = pneg %p133
        %s228 = smul.u32 4, %s16
        %p229 = scmp.lt.s32.totalorder %s228, 11
        %s230 = scalar_select %p229, %s228, 11
        %s231 = smul.addr %s230, 4
        %s232 = scalar_lea.vmem %s0, %s231
        %s233 = smul.u32 4, %s16
        %s234 = smul.u32 4, %s16
        %p235 = scmp.lt.s32.totalorder %s234, 11
        %s236 = scalar_select %p235, %s234, 11
        %s237 = smul.addr %s236, 4
        %s238 = scalar_lea.vmem %s1, %s237
        %s239 = smul.u32 4, %s16
        %s240 = smul.u32 4, %s16
        %p241 = scmp.lt.s32.totalorder %s240, 11
        %s242 = scalar_select %p241, %s240, 11
        %s243 = smul.addr %s242, 8
        %s244 = scalar_lea.vmem %s2, %s243
        %s245 = smul.u32 4, %s16
        %s246 = smul.u32 4, %s16
        %p247 = scmp.lt.s32.totalorder %s246, 11
        %s248 = scalar_select %p247, %s246, 11
        %s249 = smul.addr %s248, 8
        %s250 = scalar_lea.vmem %s3, %s249
        %s251 = smul.u32 4, %s16
        %p252 = scmp.eq.s32.totalorder %s16, 0
        // Predicated region
        $region37: #{tpu_custom_call.1} parent=35 // pred_check
          %p253 = pneg %p252
        $region38: #{tpu_custom_call.1} parent=35 // pred_check_branch
          %255 = sbr.rel (%p253) target = $region40
        $region39: #{tpu_custom_call.1} parent=35 // pred_region
          %vm256 = vcmask 122880
          %257 = vst.msk [vmem:[#allocation2] sm:$0x1] %vm256, 0.0
          %258 = vst.msk [vmem:[#allocation3] sm:$0x1] %vm256, 0.0
          %vm259 = vcmask 0
          %260 = vst.msk [vmem:[#allocation4] sm:$0x1] %vm259, 0.0
          %261 = vst.msk [vmem:[#allocation5] sm:$0x1] %vm259, 0.0
          %vm262 = vcmask 253952
          %263 = vst.msk [vmem:[#allocation6] sm:$0x1] %vm262, 0.0
          %264 = vst.msk [vmem:[#allocation7] sm:$0x1] %vm262, 0.0
          %265 = vst.msk [vmem:[#allocation8] sm:$0x1] %vm259, 0.0
          %266 = vst.msk [vmem:[#allocation9] sm:$0x1] %vm259, 0.0
          %267 = vst.msk [vmem:[#allocation10] sm:$0x1] %vm259, 0.0
        $region40: #{tpu_custom_call.1} parent=35 // pred_fallthru
          _
        %v268 = vld [vmem:[%s232] sm:$0xf]
        %v269 = vld [vmem:[%s232 + $0x4] sm:$0xf]
        %v270 = vld [vmem:[%s232 + $0x8] sm:$0xf]
        %v271 = vld [vmem:[%s232 + $0xc] sm:$0xf]
        %v272 = vunpack.c.l.bf16 %v268
        %v273 = vunpack.c.l.bf16 %v269
        %v274 = vunpack.c.l.bf16 %v270
        %v275 = vunpack.c.l.bf16 %v271
        %v276 = vld [vmem:[%s244] sm:$0xff]
        %v277 = vld [vmem:[%s244 + $0x8] sm:$0xff]
        %v278 = vld [vmem:[%s244 + $0x10] sm:$0xff]
        %v279 = vld [vmem:[%s244 + $0x18] sm:$0xff]
        %v280 = vmin.f32 %v272, 0.0
        %v281 = vmin.f32 %v273, 0.0
        %v282 = vmin.f32 %v274, 0.0
        %v283 = vmin.f32 %v275, 0.0
        %v284 = vand.u32 2147483647, %v272
        %v285 = vand.u32 2147483647, %v273
        %v286 = vand.u32 2147483647, %v274
        %v287 = vand.u32 2147483647, %v275
        %v288 = vsub.f32 0.0, %v284
        %v289 = vsub.f32 0.0, %v285
        %v290 = vsub.f32 0.0, %v286
        %v291 = vsub.f32 0.0, %v287
        %v292 = vmul.f32 %v288, 1.442695
        %v293 = vpow.pop %v292
        %v294 = vmul.f32 %v289, 1.442695
        %v295 = vpow.pop %v294
        %v296 = vmul.f32 %v290, 1.442695
        %v297 = vpow.pop %v296
        %v298 = vmul.f32 %v291, 1.442695
        %v299 = vpow.pop %v298
        %v300 = vadd.f32 %v293, 1.0
        %v301 = vlog2.pop %v300
        %v302 = vmul.f32 %v301, 0.6931472
        %v303 = vmul.f32 -0.5, %v293
        %v304 = vadd.f32 %v303, 1.0
        %v305 = vmul.f32 %v304, %v293
        %v306 = vand.u32 2147483647, %v293
        %vm307 = vcmp.lt.f32.partialorder %v306, 0.0004427343
        %v308 = vsel %vm307, %v305, %v302
        %v309 = vadd.f32 %v295, 1.0
        %v310 = vlog2.pop %v309
        %v311 = vmul.f32 %v310, 0.6931472
        %v312 = vmul.f32 -0.5, %v295
        %v313 = vadd.f32 %v312, 1.0
        %v314 = vmul.f32 %v313, %v295
        %v315 = vand.u32 2147483647, %v295
        %vm316 = vcmp.lt.f32.partialorder %v315, 0.0004427343
        %v317 = vsel %vm316, %v314, %v311
        %v318 = vadd.f32 %v297, 1.0
        %v319 = vlog2.pop %v318
        %v320 = vmul.f32 %v319, 0.6931472
        %v321 = vmul.f32 -0.5, %v297
        %v322 = vadd.f32 %v321, 1.0
        %v323 = vmul.f32 %v322, %v297
        %v324 = vand.u32 2147483647, %v297
        %vm325 = vcmp.lt.f32.partialorder %v324, 0.0004427343
        %v326 = vsel %vm325, %v323, %v320
        %v327 = vadd.f32 %v299, 1.0
        %v328 = vlog2.pop %v327
        %v329 = vmul.f32 %v328, 0.6931472
        %v330 = vmul.f32 -0.5, %v299
        %v331 = vadd.f32 %v330, 1.0
        %v332 = vmul.f32 %v331, %v299
        %v333 = vand.u32 2147483647, %v299
        %vm334 = vcmp.lt.f32.partialorder %v333, 0.0004427343
        %v335 = vsel %vm334, %v332, %v329
        %v336 = vsub.f32 %v280, %v308
        %v337 = vsub.f32 %v281, %v317
        %v338 = vsub.f32 %v282, %v326
        %v339 = vsub.f32 %v283, %v335
        %v340 = vsub.f32 %v336, %v272
        %v341 = vsub.f32 %v337, %v273
        %v342 = vsub.f32 %v338, %v274
        %v343 = vsub.f32 %v339, %v275
        %v344 = vmul.f32 %v336, 1.442695
        %v345 = vpow.pop %v344
        %v346 = vmul.f32 %v337, 1.442695
        %v347 = vpow.pop %v346
        %v348 = vmul.f32 %v338, 1.442695
        %v349 = vpow.pop %v348
        %v350 = vmul.f32 %v339, 1.442695
        %v351 = vpow.pop %v350
        %v352 = vmul.f32 %v276, %v336
        %v353 = vmul.f32 %v277, %v337
        %v354 = vmul.f32 %v278, %v338
        %v355 = vmul.f32 %v279, %v339
        %v356 = vsub.f32 1.0, %v276
        %v357 = vsub.f32 1.0, %v277
        %v358 = vsub.f32 1.0, %v278
        %v359 = vsub.f32 1.0, %v279
        %v360 = vmul.f32 %v356, %v340
        %v361 = vmul.f32 %v357, %v341
        %v362 = vmul.f32 %v358, %v342
        %v363 = vmul.f32 %v359, %v343
        %v364 = vsub.f32 1.0, %v345
        %v365 = vsub.f32 1.0, %v347
        %v366 = vsub.f32 1.0, %v349
        %v367 = vsub.f32 1.0, %v351
        %v368 = vmul.f32 %v364, %v364
        %v369 = vmul.f32 %v365, %v365
        %v370 = vmul.f32 %v366, %v366
        %v371 = vmul.f32 %v367, %v367
        %v372 = vmul.f32 %v368, %v352
        %v373 = vmul.f32 %v369, %v353
        %v374 = vmul.f32 %v370, %v354
        %v375 = vmul.f32 %v371, %v355
        %v376 = vld [vmem:[#allocation2] sm:$0x1]
        %vm377 = vcmask 130048
        %v378 = vsel %vm377, %v276, 0.0
        %v379 = vsel %vm377, %v277, 0.0
        %v380 = vadd.f32 %v378, %v379
        %v381 = vsel %vm377, %v278, 0.0
        %v382 = vadd.f32 %v380, %v381
        %v383 = vsel %vm377, %v279, 0.0
        %v384 = vadd.f32 %v382, %v383
        %v385 = vrot.slane %v384, 4
        %v386 = vadd.f32 %v384, %v385
        %v387 = vrot.slane %v386, 2
        %v388 = vadd.f32 %v386, %v387
        %v389 = vrot.slane %v388, 1
        %v390 = vadd.f32 %v388, %v389
        %v391 = vadd.f32 %v376, %v390
        %vm392 = vcmask 122880
        %393 = vst.msk [vmem:[#allocation2] sm:$0x1] %vm392, %v391
        %v394 = vld [vmem:[#allocation3] sm:$0x1]
        %v395 = vsel %vm377, %v352, 0.0
        %v396 = vsel %vm377, %v353, 0.0
        %v397 = vadd.f32 %v395, %v396
        %v398 = vsel %vm377, %v354, 0.0
        %v399 = vadd.f32 %v397, %v398
        %v400 = vsel %vm377, %v355, 0.0
        %v401 = vadd.f32 %v399, %v400
        %v402 = vrot.slane %v401, 4
        %v403 = vadd.f32 %v401, %v402
        %v404 = vrot.slane %v403, 2
        %v405 = vadd.f32 %v403, %v404
        %v406 = vrot.slane %v405, 1
        %v407 = vadd.f32 %v405, %v406
        %v408 = vadd.f32 %v394, %v407
        %409 = vst.msk [vmem:[#allocation3] sm:$0x1] %vm392, %v408
        %v410 = vld [vmem:[#allocation4] sm:$0x1]
        %v411 = vsel %vm377, %v360, 0.0
        %v412 = vsel %vm377, %v361, 0.0
        %v413 = vadd.f32 %v411, %v412
        %v414 = vsel %vm377, %v362, 0.0
        %v415 = vadd.f32 %v413, %v414
        %v416 = vsel %vm377, %v363, 0.0
        %v417 = vadd.f32 %v415, %v416
        %418 = vadd.xlane.f32.xlu0 %v417
        %v419 = vpop.xlane.xlu0 %418
        %v420 = vrot.slane %v419, 4
        %v421 = vadd.f32 %v419, %v420
        %v422 = vrot.slane %v421, 2
        %v423 = vadd.f32 %v421, %v422
        %v424 = vrot.slane %v423, 1
        %v425 = vadd.f32 %v423, %v424
        %s426 = vtos %v425
        %v427 = vstv %s426
        %v428 = vadd.f32 %v410, %v427
        %vm429 = vcmask 0
        %430 = vst.msk [vmem:[#allocation4] sm:$0x1] %vm429, %v428
        %v431 = vld [vmem:[#allocation5] sm:$0x1]
        %v432 = vsel %vm377, %v372, 0.0
        %v433 = vsel %vm377, %v373, 0.0
        %v434 = vadd.f32 %v432, %v433
        %v435 = vsel %vm377, %v374, 0.0
        %v436 = vadd.f32 %v434, %v435
        %v437 = vsel %vm377, %v375, 0.0
        %v438 = vadd.f32 %v436, %v437
        %439 = vadd.xlane.f32.xlu0 %v438
        %v440 = vpop.xlane.xlu0 %439
        %v441 = vrot.slane %v440, 4
        %v442 = vadd.f32 %v440, %v441
        %v443 = vrot.slane %v442, 2
        %v444 = vadd.f32 %v442, %v443
        %v445 = vrot.slane %v444, 1
        %v446 = vadd.f32 %v444, %v445
        %s447 = vtos %v446
        %v448 = vstv %s447
        %v449 = vadd.f32 %v431, %v448
        %450 = vst.msk [vmem:[#allocation5] sm:$0x1] %vm429, %v449
        %v451 = vld [vmem:[%s238] sm:$0xf]
        %v452 = vld [vmem:[%s238 + $0x4] sm:$0xf]
        %v453 = vld [vmem:[%s238 + $0x8] sm:$0xf]
        %v454 = vld [vmem:[%s238 + $0xc] sm:$0xf]
        %v455 = vunpack.c.l.bf16 %v451
        %v456 = vunpack.c.l.bf16 %v452
        %v457 = vunpack.c.l.bf16 %v453
        %v458 = vunpack.c.l.bf16 %v454
        %v459 = vld [vmem:[%s250] sm:$0xff]
        %v460 = vld [vmem:[%s250 + $0x8] sm:$0xff]
        %v461 = vld [vmem:[%s250 + $0x10] sm:$0xff]
        %v462 = vld [vmem:[%s250 + $0x18] sm:$0xff]
        %v463 = vmin.f32 %v455, 0.0
        %v464 = vmin.f32 %v456, 0.0
        %v465 = vmin.f32 %v457, 0.0
        %v466 = vmin.f32 %v458, 0.0
        %v467 = vand.u32 2147483647, %v455
        %v468 = vand.u32 2147483647, %v456
        %v469 = vand.u32 2147483647, %v457
        %v470 = vand.u32 2147483647, %v458
        %v471 = vsub.f32 0.0, %v467
        %v472 = vsub.f32 0.0, %v468
        %v473 = vsub.f32 0.0, %v469
        %v474 = vsub.f32 0.0, %v470
        %v475 = vmul.f32 %v471, 1.442695
        %v476 = vpow.pop %v475
        %v477 = vmul.f32 %v472, 1.442695
        %v478 = vpow.pop %v477
        %v479 = vmul.f32 %v473, 1.442695
        %v480 = vpow.pop %v479
        %v481 = vmul.f32 %v474, 1.442695
        %v482 = vpow.pop %v481
        %v483 = vadd.f32 %v476, 1.0
        %v484 = vlog2.pop %v483
        %v485 = vmul.f32 %v484, 0.6931472
        %v486 = vmul.f32 -0.5, %v476
        %v487 = vadd.f32 %v486, 1.0
        %v488 = vmul.f32 %v487, %v476
        %v489 = vand.u32 2147483647, %v476
        %vm490 = vcmp.lt.f32.partialorder %v489, 0.0004427343
        %v491 = vsel %vm490, %v488, %v485
        %v492 = vadd.f32 %v478, 1.0
        %v493 = vlog2.pop %v492
        %v494 = vmul.f32 %v493, 0.6931472
        %v495 = vmul.f32 -0.5, %v478
        %v496 = vadd.f32 %v495, 1.0
        %v497 = vmul.f32 %v496, %v478
        %v498 = vand.u32 2147483647, %v478
        %vm499 = vcmp.lt.f32.partialorder %v498, 0.0004427343
        %v500 = vsel %vm499, %v497, %v494
        %v501 = vadd.f32 %v480, 1.0
        %v502 = vlog2.pop %v501
        %v503 = vmul.f32 %v502, 0.6931472
        %v504 = vmul.f32 -0.5, %v480
        %v505 = vadd.f32 %v504, 1.0
        %v506 = vmul.f32 %v505, %v480
        %v507 = vand.u32 2147483647, %v480
        %vm508 = vcmp.lt.f32.partialorder %v507, 0.0004427343
        %v509 = vsel %vm508, %v506, %v503
        %v510 = vadd.f32 %v482, 1.0
        %v511 = vlog2.pop %v510
        %v512 = vmul.f32 %v511, 0.6931472
        %v513 = vmul.f32 -0.5, %v482
        %v514 = vadd.f32 %v513, 1.0
        %v515 = vmul.f32 %v514, %v482
        %v516 = vand.u32 2147483647, %v482
        %vm517 = vcmp.lt.f32.partialorder %v516, 0.0004427343
        %v518 = vsel %vm517, %v515, %v512
        %v519 = vsub.f32 %v463, %v491
        %v520 = vsub.f32 %v464, %v500
        %v521 = vsub.f32 %v465, %v509
        %v522 = vsub.f32 %v466, %v518
        %v523 = vsub.f32 %v519, %v455
        %v524 = vsub.f32 %v520, %v456
        %v525 = vsub.f32 %v521, %v457
        %v526 = vsub.f32 %v522, %v458
        %v527 = vmul.f32 %v519, 1.442695
        %v528 = vpow.pop %v527
        %v529 = vmul.f32 %v520, 1.442695
        %v530 = vpow.pop %v529
        %v531 = vmul.f32 %v521, 1.442695
        %v532 = vpow.pop %v531
        %v533 = vmul.f32 %v522, 1.442695
        %v534 = vpow.pop %v533
        %v535 = vmul.f32 %v459, %v519
        %v536 = vmul.f32 %v460, %v520
        %v537 = vmul.f32 %v461, %v521
        %v538 = vmul.f32 %v462, %v522
        %v539 = vsub.f32 1.0, %v459
        %v540 = vsub.f32 1.0, %v460
        %v541 = vsub.f32 1.0, %v461
        %v542 = vsub.f32 1.0, %v462
        %v543 = vmul.f32 %v539, %v523
        %v544 = vmul.f32 %v540, %v524
        %v545 = vmul.f32 %v541, %v525
        %v546 = vmul.f32 %v542, %v526
        %v547 = vsub.f32 1.0, %v528
        %v548 = vsub.f32 1.0, %v530
        %v549 = vsub.f32 1.0, %v532
        %v550 = vsub.f32 1.0, %v534
        %v551 = vmul.f32 %v547, %v547
        %v552 = vmul.f32 %v548, %v548
        %v553 = vmul.f32 %v549, %v549
        %v554 = vmul.f32 %v550, %v550
        %v555 = vmul.f32 %v551, %v535
        %v556 = vmul.f32 %v552, %v536
        %v557 = vmul.f32 %v553, %v537
        %v558 = vmul.f32 %v554, %v538
        %v559 = vld [vmem:[#allocation6] sm:$0x1]
        %vm560 = vcmask 261120
        %v561 = vsel %vm560, %v459, 0.0
        %v562 = vsel %vm560, %v460, 0.0
        %v563 = vadd.f32 %v561, %v562
        %v564 = vsel %vm560, %v461, 0.0
        %v565 = vadd.f32 %v563, %v564
        %v566 = vsel %vm560, %v462, 0.0
        %v567 = vadd.f32 %v565, %v566
        %v568 = vrot.slane %v567, 4
        %v569 = vadd.f32 %v567, %v568
        %v570 = vrot.slane %v569, 2
        %v571 = vadd.f32 %v569, %v570
        %v572 = vrot.slane %v571, 1
        %v573 = vadd.f32 %v571, %v572
        %v574 = vadd.f32 %v559, %v573
        %vm575 = vcmask 253952
        %576 = vst.msk [vmem:[#allocation6] sm:$0x1] %vm575, %v574
        %v577 = vld [vmem:[#allocation7] sm:$0x1]
        %v578 = vsel %vm560, %v535, 0.0
        %v579 = vsel %vm560, %v536, 0.0
        %v580 = vadd.f32 %v578, %v579
        %v581 = vsel %vm560, %v537, 0.0
        %v582 = vadd.f32 %v580, %v581
        %v583 = vsel %vm560, %v538, 0.0
        %v584 = vadd.f32 %v582, %v583
        %v585 = vrot.slane %v584, 4
        %v586 = vadd.f32 %v584, %v585
        %v587 = vrot.slane %v586, 2
        %v588 = vadd.f32 %v586, %v587
        %v589 = vrot.slane %v588, 1
        %v590 = vadd.f32 %v588, %v589
        %v591 = vadd.f32 %v577, %v590
        %592 = vst.msk [vmem:[#allocation7] sm:$0x1] %vm575, %v591
        %v593 = vld [vmem:[#allocation8] sm:$0x1]
        %v594 = vsel %vm560, %v543, 0.0
        %v595 = vsel %vm560, %v544, 0.0
        %v596 = vadd.f32 %v594, %v595
        %v597 = vsel %vm560, %v545, 0.0
        %v598 = vadd.f32 %v596, %v597
        %v599 = vsel %vm560, %v546, 0.0
        %v600 = vadd.f32 %v598, %v599
        %601 = vadd.xlane.f32.xlu0 %v600
        %v602 = vpop.xlane.xlu0 %601
        %v603 = vrot.slane %v602, 4
        %v604 = vadd.f32 %v602, %v603
        %v605 = vrot.slane %v604, 2
        %v606 = vadd.f32 %v604, %v605
        %v607 = vrot.slane %v606, 1
        %v608 = vadd.f32 %v606, %v607
        %s609 = vtos %v608
        %v610 = vstv %s609
        %v611 = vadd.f32 %v593, %v610
        %612 = vst.msk [vmem:[#allocation8] sm:$0x1] %vm429, %v611
        %v613 = vld [vmem:[#allocation9] sm:$0x1]
        %v614 = vsel %vm560, %v555, 0.0
        %v615 = vsel %vm560, %v556, 0.0
        %v616 = vadd.f32 %v614, %v615
        %v617 = vsel %vm560, %v557, 0.0
        %v618 = vadd.f32 %v616, %v617
        %v619 = vsel %vm560, %v558, 0.0
        %v620 = vadd.f32 %v618, %v619
        %621 = vadd.xlane.f32.xlu0 %v620
        %v622 = vpop.xlane.xlu0 %621
        %v623 = vrot.slane %v622, 4
        %v624 = vadd.f32 %v622, %v623
        %v625 = vrot.slane %v624, 2
        %v626 = vadd.f32 %v624, %v625
        %v627 = vrot.slane %v626, 1
        %v628 = vadd.f32 %v626, %v627
        %s629 = vtos %v628
        %v630 = vstv %s629
        %v631 = vadd.f32 %v613, %v630
        %632 = vst.msk [vmem:[#allocation9] sm:$0x1] %vm429, %v631
        %v633 = vsel %vm560, %v528, -inf
        %634 = vmax.xlane.f32.xlu0 %v633
        %v635 = vpop.xlane.xlu0 %634
        %v636 = vsel %vm560, %v530, -inf
        %637 = vmax.xlane.f32.xlu0 %v636
        %v638 = vpop.xlane.xlu0 %637
        %v639 = vsel %vm560, %v532, -inf
        %640 = vmax.xlane.f32.xlu0 %v639
        %v641 = vpop.xlane.xlu0 %640
        %v642 = vsel %vm560, %v534, -inf
        %643 = vmax.xlane.f32.xlu0 %v642
        %v644 = vpop.xlane.xlu0 %643
        %v645 = vsel %vm377, %v345, -inf
        %646 = vmax.xlane.f32.xlu0 %v645
        %v647 = vpop.xlane.xlu0 %646
        %v648 = vsel %vm377, %v347, -inf
        %649 = vmax.xlane.f32.xlu0 %v648
        %v650 = vpop.xlane.xlu0 %649
        %v651 = vsel %vm377, %v349, -inf
        %652 = vmax.xlane.f32.xlu0 %v651
        %v653 = vpop.xlane.xlu0 %652
        %v654 = vsel %vm377, %v351, -inf
        %655 = vmax.xlane.f32.xlu0 %v654
        %v656 = vpop.xlane.xlu0 %655
        %v657 = vsub.f32 %v635, %v647
        %v658 = vsub.f32 %v638, %v650
        %v659 = vsub.f32 %v641, %v653
        %v660 = vsub.f32 %v644, %v656
        %v661 = vmax.f32 %v657, 0.0
        %v662 = vmax.f32 %v658, 0.0
        %v663 = vmax.f32 %v659, 0.0
        %v664 = vmax.f32 %v660, 0.0
        %v665 = vld [vmem:[#allocation10] sm:$0x1]
        %vm666 = vcmask 7168
        %v667 = vsel %vm666, %v661, 0.0
        %v668 = vsel %vm666, %v662, 0.0
        %v669 = vadd.f32 %v667, %v668
        %v670 = vsel %vm666, %v663, 0.0
        %v671 = vadd.f32 %v669, %v670
        %v672 = vsel %vm666, %v664, 0.0
        %v673 = vadd.f32 %v671, %v672
        %674 = vadd.xlane.f32.xlu0 %v673
        %v675 = vpop.xlane.xlu0 %674
        %v676 = vrot.slane %v675, 4
        %v677 = vadd.f32 %v675, %v676
        %v678 = vrot.slane %v677, 2
        %v679 = vadd.f32 %v677, %v678
        %v680 = vrot.slane %v679, 1
        %v681 = vadd.f32 %v679, %v680
        %s682 = vtos %v681
        %v683 = vstv %s682
        %v684 = vadd.f32 %v665, %v683
        %685 = vst.msk [vmem:[#allocation10] sm:$0x1] %vm429, %v684
        %p686 = scmp.eq.s32.totalorder %s16, 2
        // Predicated region
        $region41: #{tpu_custom_call.1} parent=35 // pred_check
          %p687 = pneg %p686
        $region42: #{tpu_custom_call.1} parent=35 // pred_check_branch
          %689 = sbr.rel (%p687) target = $region44
        $region43: #{tpu_custom_call.1} parent=35 // pred_region
          %v690 = vld [vmem:[#allocation2] sm:$0x1]
          %v691 = vsub.f32 96.0, %v690
          %v692 = vadd.f32 %v690, 1e-06
          %v693 = vrcp.pop %v692
          %v694 = vmul.f32 %v691, %v693
          %v695 = vmax.f32 %v694, 1.0
          %v696 = vmin.f32 %v695, 50.0
          %v697 = vld [vmem:[#allocation3] sm:$0x1]
          %v698 = vmul.f32 %v696, %v697
          %v699 = vsel %vm392, %v698, 0.0
          %700 = vadd.xlane.f32.xlu0 %v699
          %v701 = vpop.xlane.xlu0 %700
          %v702 = vrot.slane %v701, 4
          %v703 = vadd.f32 %v701, %v702
          %v704 = vrot.slane %v703, 2
          %v705 = vadd.f32 %v703, %v704
          %v706 = vrot.slane %v705, 1
          %v707 = vadd.f32 %v705, %v706
          %s708 = vtos %v707
          %v709 = vld [vmem:[#allocation4] sm:$0x1]
          %v710 = vadd.f32 %v709, 0.0
          %s711 = vtos %v710
          %s712 = sadd.f32 %s708, %s711
          %s713 = ssub.f32 0.0, %s712
          %s714 = smul.f32 %s713, 0.0006510417
          %v715 = vld [vmem:[#allocation6] sm:$0x1]
          %v716 = vsub.f32 96.0, %v715
          %v717 = vadd.f32 %v715, 1e-06
          %v718 = vrcp.pop %v717
          %v719 = vmul.f32 %v716, %v718
          %v720 = vmax.f32 %v719, 1.0
          %v721 = vmin.f32 %v720, 50.0
          %v722 = vld [vmem:[#allocation7] sm:$0x1]
          %v723 = vmul.f32 %v721, %v722
          %v724 = vsel %vm575, %v723, 0.0
          %725 = vadd.xlane.f32.xlu0 %v724
          %v726 = vpop.xlane.xlu0 %725
          %v727 = vrot.slane %v726, 4
          %v728 = vadd.f32 %v726, %v727
          %v729 = vrot.slane %v728, 2
          %v730 = vadd.f32 %v728, %v729
          %v731 = vrot.slane %v730, 1
          %v732 = vadd.f32 %v730, %v731
          %s733 = vtos %v732
          %v734 = vld [vmem:[#allocation8] sm:$0x1]
          %v735 = vadd.f32 %v734, 0.0
          %s736 = vtos %v735
          %s737 = sadd.f32 %s733, %s736
          %s738 = ssub.f32 0.0, %s737
          %s739 = smul.f32 %s738, 0.00032552084
          %v740 = vld [vmem:[#allocation5] sm:$0x1]
          %v741 = vadd.f32 %v740, 0.0
          %s742 = vtos %v741
          %s743 = smul.f32 %s742, 0.0006510417
          %v744 = vld [vmem:[#allocation9] sm:$0x1]
          %v745 = vadd.f32 %v744, 0.0
          %s746 = vtos %v745
          %s747 = smul.f32 %s746, 0.00032552084
          %v748 = vld [vmem:[#allocation10] sm:$0x1]
          %v749 = vadd.f32 %v748, 0.0
          %s750 = vtos %v749
          %s751 = smul.f32 %s750, 0.010416667
          %s752 = smul.f32 %s743, 0.1
          %s753 = ssub.f32 %s714, %s752
          %s754 = smul.f32 %s747, 0.1
          %s755 = ssub.f32 %s739, %s754
          %s756 = sadd.f32 %s753, %s755
          %s757 = smul.f32 %s751, 0.5
          %s758 = sadd.f32 %s756, %s757
          %s759 = scalar_lea.smem [#allocation11], 0
          %760 = sst [smem:[%s759]] %s758
          %s761 = scalar_lea.smem [#allocation11], 1
          %762 = sst [smem:[%s761]] %s714
          %s763 = scalar_lea.smem [#allocation11], 2
          %764 = sst [smem:[%s763]] %s739
          %s765 = scalar_lea.smem [#allocation11], 3
          %766 = sst [smem:[%s765]] %s751
          %s767 = scalar_lea.smem [#allocation11], 4
          %768 = sst [smem:[%s767]] %s743
          %s769 = scalar_lea.smem [#allocation11], 5
          %770 = sst [smem:[%s769]] %s747
        $region44: #{tpu_custom_call.1} parent=35 // pred_fallthru
          _
        // Predicated region
        $region45: #{tpu_custom_call.1} parent=35 // pred_check
          %p771 = pneg %p133
        $region46: #{tpu_custom_call.1} parent=35 // pred_check_branch
          %773 = sbr.rel (%p771) target = $region48
        $region47: #{tpu_custom_call.1} parent=35 // pred_region
          %s775 = ssub.s32 16, 16
          %776 = vsyncadd [#allocation12], %s775
          %779 = dma.smem_to_hbm [#allocation11], 16, %s4, [#allocation12]
        $region48: #{tpu_custom_call.1} parent=35 // pred_fallthru
          _
        // Predicated region
        $region49: #{tpu_custom_call.1} parent=35 // pred_check
          %p780 = pneg %p133
        $region50: #{tpu_custom_call.1} parent=35 // pred_check_branch
          %782 = sbr.rel (%p780) target = $region52
        $region51: #{tpu_custom_call.1} parent=35 // pred_region
          %783 = dma.done [#allocation12], 16
        $region52: #{tpu_custom_call.1} parent=35 // pred_fallthru
          _
        %784 = sfence
      $region36: #{tpu_custom_call.1} parent=5 // pred_fallthru
        _
      %p785 = scmp.le.s32.totalorder 2, %s11
      // Predicated region
      $region53: #{tpu_custom_call.1} parent=5 // pred_check
        %p786 = pneg %p785
      $region54: #{tpu_custom_call.1} parent=5 // pred_check_branch
        %788 = sbr.rel (%p786) target = $region56
      $region55: #{tpu_custom_call.1} parent=5 // pred_region
        %s789 = ssub.s32 %s11, 2
      $region56: #{tpu_custom_call.1} parent=5 // pred_fallthru
        _
    $region6: #{tpu_custom_call.1} parent=1 // loop_footer
      %s15 = sadd.s32 1, %s11
    $region7: #{tpu_custom_call.1} parent=1 // loop_footer_branch
      %10 = sbr.rel target = $region3
    $region8: #{tpu_custom_call.1} parent=1 // loop_exit
      _
    %790 = vsyncpa [#allocation12], 1
    %s791 = scalar_lea.sflag [#allocation12], 1
    %792 = vsyncpa %s791, 1

</llo_original>
